<compile_context>
chip_gen: v7x
topology: tpu7x:2x2x1
jax: 0.10.0
libtpu: 0.0.40
codegen_flags: <defaults>
</compile_context>

<pallas_src>
import functools

import jax
import jax.numpy as jnp
from jax import lax
from jax.experimental import pallas as pl
from jax.experimental.pallas import tpu as pltpu

_NEG_INF = -1e30


def _round_up(x, m):
    return (x + m - 1) // m * m


def _rnn_block_kernel(x_ref, h0_ref, wx_ref, wh_ref, b_ref, out_ref, hfin_ref,
                      h_scr, p_scr, *, tb, b_pad, h_pad, t_real, gated,
                      compute_dtype):
    """One grid step == one block of `tb` RNN timesteps.

    h_scr: (B_pad, H_pad) f32 scratch holding the carried hidden state
           (persists across grid iterations).
    p_scr: (tb, B_pad, HO_pad) f32 scratch holding the hoisted input projection
           P = x @ [Wxh|Wxo] + bias for the whole block.
    """
    blk = pl.program_id(0)

    # Load the initial hidden state into the resident scratch once.
    @pl.when(blk == 0)
    def _init():
        h_scr[...] = h0_ref[...]

    # ---- hoisted input projection for the whole time block (one big GEMM) ----
    i_pad = x_ref.shape[-1]
    ho_pad = wx_ref.shape[-1]
    x_blk = x_ref[...].reshape(tb * b_pad, i_pad)
    p = jnp.dot(x_blk, wx_ref[...], preferred_element_type=jnp.float32)
    # Bias carries the padded-logit mask (-1e30 on padded output lanes).
    p_scr[...] = (p + b_ref[...]).reshape(tb, b_pad, ho_pad)

    wh = wh_ref[...]  # (H_pad, HO_pad), resident in VMEM, loaded once per block

    def step(s, h):
        # Recurrent half only: y = P[s] + h @ [Whh | Who]   (f32 accumulate).
        y = p_scr[s] + jnp.dot(h.astype(compute_dtype), wh,
                               preferred_element_type=jnp.float32)
        new_h = y[:, :h_pad]           # (B_pad, H_pad) f32
        logits = y[:, h_pad:]          # (B_pad, O_pad) f32, padded lanes ~ -1e30

        # Numerically stable log-softmax along the feature axis.
        m = jnp.max(logits, axis=-1, keepdims=True)
        shifted = logits - m
        lse = jnp.log(jnp.sum(jnp.exp(shifted), axis=-1, keepdims=True))
        out_ref[s] = (shifted - lse).astype(out_ref.dtype)

        if gated:
            # Gate the carry so zero-padded trailing timesteps (T padded up to a
            # multiple of tb) do not disturb the final hidden state.
            t_glob = blk * tb + s
            return jnp.where(t_glob < t_real, new_h, h)
        return new_h

    h_final = lax.fori_loop(0, tb, step, h_scr[...], unroll=True)
    h_scr[...] = h_final

    # Final hidden: resident output block, written once on the last grid step.
    @pl.when(blk == pl.num_programs(0) - 1)
    def _fin():
        hfin_ref[...] = h_final


@functools.partial(jax.jit, static_argnames=("compute_dtype", "block_t"))
def rnn_sequence(xs, h0, wh_t, bh, wo_t, bo, *, compute_dtype=jnp.float32,
                 block_t=16):
    """Run the RNN cell over a whole sequence in ONE pallas_call.

    xs:   (T, B, input_size)  f32
    h0:   (B, hidden_size)    f32
    wh_t: (input_size + hidden_size, hidden_size)   (i2h weight, pre-transposed)
    bh:   (hidden_size,)
    wo_t: (input_size + hidden_size, output_size)   (i2o weight, pre-transposed)
    bo:   (output_size,)

    Returns (log_softmax outputs (T, B, output_size), final hidden (B, hidden_size)).
    """
    T, B, I = xs.shape
    H = wh_t.shape[1]
    O = wo_t.shape[1]
    assert wh_t.shape[0] == I + H and wo_t.shape[0] == I + H

    # Pad to vreg / MXU friendly shapes.  Sub-32-bit compute dtypes pack along
    # sublanes, so the batch rounds to 16 for bf16 (8 for f32); features -> 128.
    packing = max(1, 4 // jnp.dtype(compute_dtype).itemsize)
    b_pad = _round_up(B, 8 * packing)
    i_pad = _round_up(I, 128)
    h_pad = _round_up(H, 128)
    o_pad = _round_up(O, 128)
    ho_pad = h_pad + o_pad

    # Time blocking: tb timesteps per grid iteration; pad T up to a multiple.
    tb = max(1, min(block_t, T))
    t_pad = _round_up(T, tb)
    n_blk = t_pad // tb
    gated = t_pad != T

    # Weight split for the hoisted projection:
    #   W_x = input rows of [Wxh | Wxo]   (I_pad, HO_pad)   -- time-parallel GEMM
    #   W_h = hidden rows of [Whh | Who]  (H_pad, HO_pad)   -- recurrent GEMM
    # Zero padding keeps padded hidden lanes exactly zero across steps.
    w_x = jnp.zeros((i_pad, ho_pad), jnp.float32)
    w_x = w_x.at[:I, :H].set(wh_t[:I])
    w_x = w_x.at[:I, h_pad:h_pad + O].set(wo_t[:I])
    w_x = w_x.astype(compute_dtype)

    w_h = jnp.zeros((h_pad, ho_pad), jnp.float32)
    w_h = w_h.at[:H, :H].set(wh_t[I:])
    w_h = w_h.at[:H, h_pad:h_pad + O].set(wo_t[I:])
    w_h = w_h.astype(compute_dtype)

    # Bias with the padded-logit mask folded in (removes per-step iota/where).
    b_cat = jnp.zeros((1, ho_pad), jnp.float32)
    b_cat = b_cat.at[0, :H].set(bh)
    b_cat = b_cat.at[0, h_pad:h_pad + O].set(bo)
    if o_pad > O:
        b_cat = b_cat.at[0, h_pad + O:].set(_NEG_INF)

    x_p = jnp.zeros((t_pad, b_pad, i_pad), compute_dtype)
    x_p = x_p.at[:T, :B, :I].set(xs.astype(compute_dtype))
    h0_p = jnp.zeros((b_pad, h_pad), jnp.float32)
    h0_p = h0_p.at[:B, :H].set(h0.astype(jnp.float32))

    kernel = functools.partial(_rnn_block_kernel, tb=tb, b_pad=b_pad,
                               h_pad=h_pad, t_real=T, gated=gated,
                               compute_dtype=compute_dtype)

    out_p, hfin_p = pl.pallas_call(
        kernel,
        out_shape=(
            jax.ShapeDtypeStruct((t_pad, b_pad, o_pad), jnp.float32),
            jax.ShapeDtypeStruct((b_pad, h_pad), jnp.float32),
        ),
        grid_spec=pltpu.PrefetchScalarGridSpec(
            num_scalar_prefetch=0,
            grid=(n_blk,),
            in_specs=[
                # per-block input slab (tb timesteps, lane-dense)
                pl.BlockSpec((tb, b_pad, i_pad), lambda t: (t, 0, 0)),
                # constant index maps: DMA'd into VMEM once, stay resident
                pl.BlockSpec((b_pad, h_pad), lambda t: (0, 0)),
                pl.BlockSpec((i_pad, ho_pad), lambda t: (0, 0)),
                pl.BlockSpec((h_pad, ho_pad), lambda t: (0, 0)),
                pl.BlockSpec((1, ho_pad), lambda t: (0, 0)),
            ],
            out_specs=(
                pl.BlockSpec((tb, b_pad, o_pad), lambda t: (t, 0, 0)),
                # final hidden: resident block, written back to HBM once
                pl.BlockSpec((b_pad, h_pad), lambda t: (0, 0)),
            ),
            scratch_shapes=[
                pltpu.VMEM((b_pad, h_pad), jnp.float32),        # hidden carry
                pltpu.VMEM((tb, b_pad, ho_pad), jnp.float32),   # block projection
            ],
        ),
        compiler_params=pltpu.CompilerParams(
            # time blocks are sequential (hidden-state carry)
            dimension_semantics=("arbitrary",),
        ),
    )(x_p, h0_p, w_x, w_h, b_cat)

    return out_p[:T, :B, :O], hfin_p[:B, :H]


def rnn_forward(inp, hidden, wh_t, bh, wo_t, bo, *, compute_dtype=jnp.float32):
    """Single step, matching RNN.forward(input, hidden) -> (output, hidden)."""
    out, new_hidden = rnn_sequence(inp[None], hidden, wh_t, bh, wo_t, bo,
                                   compute_dtype=compute_dtype)
    return out[0], new_hidden


def init_hidden(hidden_size, batch=1):
    """Mirrors RNN.initHidden()."""
    return jnp.zeros((batch, hidden_size), jnp.float32)


def init_params(key, input_size, hidden_size, output_size):
    """nn.Linear-style init; weights stored pre-transposed as (in, out)."""
    c = input_size + hidden_size
    k1, k2, k3, k4 = jax.random.split(key, 4)
    bound = float(c) ** -0.5
    wh_t = jax.random.uniform(k1, (c, hidden_size), jnp.float32, -bound, bound)
    bh = jax.random.uniform(k2, (hidden_size,), jnp.float32, -bound, bound)
    wo_t = jax.random.uniform(k3, (c, output_size), jnp.float32, -bound, bound)
    bo = jax.random.uniform(k4, (output_size,), jnp.float32, -bound, bound)
    return wh_t, bh, wo_t, bo


if __name__ == "__main__":
    input_size, hidden_size, output_size = 16, 32, 8
    batch, seq_len = 2, 8

    key = jax.random.PRNGKey(0)
    kx, kp = jax.random.split(key)

    xs = jax.random.normal(kx, (seq_len, batch, input_size), jnp.float32)
    h0 = jnp.broadcast_to(init_hidden(hidden_size), (batch, hidden_size))
    wh_t, bh, wo_t, bo = init_params(kp, input_size, hidden_size, output_size)

    # ---- pure-JAX reference ----
    def ref_step(h, x):
        c = jnp.concatenate([x, h], axis=1)
        h_new = c @ wh_t + bh
        o = jax.nn.log_softmax(c @ wo_t + bo, axis=1)
        return h_new, o

    ref_hT, ref_outs = jax.lax.scan(ref_step, h0, xs)

    # ---- single step: matches RNN.forward(input, hidden) semantics ----
    out1, h1 = rnn_forward(xs[0], h0, wh_t, bh, wo_t, bo)
    jax.block_until_ready((out1, h1))
    assert out1.shape == (batch, output_size) and h1.shape == (batch, hidden_size)
    assert jnp.allclose(out1, ref_outs[0], atol=1e-4), "single-step output mismatch"
    assert jnp.allclose(h1, ref_hT if seq_len == 1 else (
        jnp.concatenate([xs[0], h0], axis=1) @ wh_t + bh), atol=1e-4), \
        "single-step hidden mismatch"

    # ---- full sequence, one pallas_call (time-blocked, projection hoisted) ----
    outs, hT = rnn_sequence(xs, h0, wh_t, bh, wo_t, bo)
    jax.block_until_ready((outs, hT))
    assert jnp.allclose(outs, ref_outs, atol=1e-4), "sequence output mismatch"
    assert jnp.allclose(hT, ref_hT, atol=1e-4), "sequence hidden mismatch"

    # ---- exercise multi-block grid + T not divisible by block_t (gated tail) ----
    outs_b, hT_b = rnn_sequence(xs, h0, wh_t, bh, wo_t, bo, block_t=5)
    jax.block_until_ready((outs_b, hT_b))
    assert jnp.allclose(outs_b, ref_outs, atol=1e-4), "blocked output mismatch"
    assert jnp.allclose(hT_b, ref_hT, atol=1e-4), "blocked hidden mismatch"

    # ---- bf16 MXU path (v6e / v7x): f32 hidden carry + f32 accumulate ----
    outs_bf, hT_bf = rnn_sequence(xs, h0, wh_t, bh, wo_t, bo,
                                  compute_dtype=jnp.bfloat16)
    jax.block_until_ready((outs_bf, hT_bf))
    assert jnp.allclose(outs_bf, ref_outs, atol=0.15, rtol=0.05), "bf16 output mismatch"
    assert jnp.allclose(hT_bf, ref_hT, atol=0.15, rtol=0.05), "bf16 hidden mismatch"

    print("KERNEL_OK")
</pallas_src>

<mosaic_0001>
module attributes {stable_mosaic.version = 11 : i64} {
  func.func @_rnn_block_kernel(%arg0: i32, %arg1: memref<1x8x128xf32, #tpu.memory_space<vmem>>, %arg2: memref<8x128xf32, #tpu.memory_space<vmem>>, %arg3: memref<128x256xf32, #tpu.memory_space<vmem>>, %arg4: memref<128x256xf32, #tpu.memory_space<vmem>>, %arg5: memref<1x256xf32, #tpu.memory_space<vmem>>, %arg6: memref<1x8x128xf32, #tpu.memory_space<vmem>>, %arg7: memref<8x128xf32, #tpu.memory_space<vmem>>, %arg8: memref<8x128xf32, #tpu.memory_space<vmem>>, %arg9: memref<1x8x256xf32, #tpu.memory_space<vmem>>) attributes {dimension_semantics = [#tpu.dimension_semantics<arbitrary>], iteration_bounds = array<i64: 1>, scalar_prefetch = 0 : i64, scratch_operands = 2 : i64, tpu.core_type = #tpu.core_type<tc>, window_params = [{transform_indices = @transform_0, window_bounds = array<i64: 1, 8, 128>}, {pipeline_mode = #tpu.pipeline_mode<synchronous>, transform_indices = @transform_1, window_bounds = array<i64: 8, 128>}, {pipeline_mode = #tpu.pipeline_mode<synchronous>, transform_indices = @transform_2, window_bounds = array<i64: 128, 256>}, {pipeline_mode = #tpu.pipeline_mode<synchronous>, transform_indices = @transform_3, window_bounds = array<i64: 128, 256>}, {pipeline_mode = #tpu.pipeline_mode<synchronous>, transform_indices = @transform_4, window_bounds = array<i64: 1, 256>}, {transform_indices = @transform_5, window_bounds = array<i64: 1, 8, 128>}, {pipeline_mode = #tpu.pipeline_mode<synchronous>, transform_indices = @transform_6, window_bounds = array<i64: 8, 128>}]} {
    %c0_i32 = arith.constant 0 : i32
    %0 = arith.cmpi eq, %arg0, %c0_i32 : i32
    %1 = arith.extui %0 : i1 to i32
    %c0_i32_0 = arith.constant 0 : i32
    %2 = arith.cmpi ne, %1, %c0_i32_0 : i32
    scf.if %2 {
      %c0_26 = arith.constant 0 : index
      %c0_27 = arith.constant 0 : index
      %39 = vector.load %arg2[%c0_26, %c0_27] : memref<8x128xf32, #tpu.memory_space<vmem>>, vector<8x128xf32>
      %c0_28 = arith.constant 0 : index
      %c0_29 = arith.constant 0 : index
      %40 = vector.load %arg8[%c0_28, %c0_29] : memref<8x128xf32, #tpu.memory_space<vmem>>, vector<8x128xf32>
      tpu.vector_store %arg8[%c0_28, %c0_29], %39 {strides = array<i32>} : memref<8x128xf32, #tpu.memory_space<vmem>>, vector<8x128xf32>,
    } else {
    }
    %c0 = arith.constant 0 : index
    %c0_1 = arith.constant 0 : index
    %c0_2 = arith.constant 0 : index
    %3 = vector.load %arg1[%c0, %c0_1, %c0_2] : memref<1x8x128xf32, #tpu.memory_space<vmem>>, vector<1x8x128xf32>
    %4 = vector.shape_cast %3 : vector<1x8x128xf32> to vector<8x128xf32>
    %c0_3 = arith.constant 0 : index
    %c0_4 = arith.constant 0 : index
    %5 = vector.load %arg3[%c0_3, %c0_4] : memref<128x256xf32, #tpu.memory_space<vmem>>, vector<128x256xf32>
    %cst = arith.constant dense<0.000000e+00> : vector<8x256xf32>
    %6 = tpu.matmul %4, %5, %cst {dimension_numbers = #tpu.dot_dimension_numbers<[1], [0], [0], [1], [0, 0, 1, 1], [], []>} : vector<8x128xf32>, vector<128x256xf32>, vector<8x256xf32> -> vector<8x256xf32>
    %c0_5 = arith.constant 0 : index
    %c0_6 = arith.constant 0 : index
    %7 = vector.load %arg5[%c0_5, %c0_6] : memref<1x256xf32, #tpu.memory_space<vmem>>, vector<1x256xf32>
    %8 = vector.broadcast %7 : vector<1x256xf32> to vector<8x256xf32>
    %9 = arith.addf %6, %8 : vector<8x256xf32>
    %10 = vector.shape_cast %9 : vector<8x256xf32> to vector<1x8x256xf32>
    %c0_7 = arith.constant 0 : index
    %c0_8 = arith.constant 0 : index
    %c0_9 = arith.constant 0 : index
    %11 = vector.load %arg9[%c0_7, %c0_8, %c0_9] : memref<1x8x256xf32, #tpu.memory_space<vmem>>, vector<1x8x256xf32>
    tpu.vector_store %arg9[%c0_7, %c0_8, %c0_9], %10 {strides = array<i32>} : memref<1x8x256xf32, #tpu.memory_space<vmem>>, vector<1x8x256xf32>,
    %c0_10 = arith.constant 0 : index
    %c0_11 = arith.constant 0 : index
    %12 = vector.load %arg4[%c0_10, %c0_11] : memref<128x256xf32, #tpu.memory_space<vmem>>, vector<128x256xf32>
    %c0_12 = arith.constant 0 : index
    %c0_13 = arith.constant 0 : index
    %13 = vector.load %arg8[%c0_12, %c0_13] : memref<8x128xf32, #tpu.memory_space<vmem>>, vector<8x128xf32>
    %c0_i32_14 = arith.constant 0 : i32
    %14 = arith.index_cast %c0_i32_14 : i32 to index
    %c0_15 = arith.constant 0 : index
    %c0_16 = arith.constant 0 : index
    %15 = vector.load %arg9[%14, %c0_15, %c0_16] : memref<1x8x256xf32, #tpu.memory_space<vmem>>, vector<1x8x256xf32>
    %16 = vector.shape_cast %15 : vector<1x8x256xf32> to vector<8x256xf32>
    %cst_17 = arith.constant dense<0.000000e+00> : vector<8x256xf32>
    %17 = tpu.matmul %13, %12, %cst_17 {dimension_numbers = #tpu.dot_dimension_numbers<[1], [0], [0], [1], [0, 0, 1, 1], [], []>} : vector<8x128xf32>, vector<128x256xf32>, vector<8x256xf32> -> vector<8x256xf32>
    %18 = arith.addf %16, %17 : vector<8x256xf32>
    %19 = vector.extract_strided_slice %18 {offsets = [0, 0], sizes = [8, 128], strides = [1, 1]} : vector<8x256xf32> to vector<8x128xf32>
    %20 = vector.extract_strided_slice %18 {offsets = [0, 128], sizes = [8, 128], strides = [1, 1]} : vector<8x256xf32> to vector<8x128xf32>
    %cst_18 = arith.constant dense<0xFF800000> : vector<8xf32>
    %21 = vector.multi_reduction <maximumf>, %20, %cst_18 [1] : vector<8x128xf32> to vector<8xf32>
    %22 = vector.shape_cast %21 : vector<8xf32> to vector<8x1xf32>
    %23 = vector.broadcast %22 : vector<8x1xf32> to vector<8x128xf32>
    %24 = arith.subf %20, %23 : vector<8x128xf32>
    %25 = math.exp %24 : vector<8x128xf32>
    %cst_19 = arith.constant dense<0.000000e+00> : vector<8xf32>
    %26 = vector.multi_reduction <add>, %25, %cst_19 [1] : vector<8x128xf32> to vector<8xf32>
    %27 = vector.shape_cast %26 : vector<8xf32> to vector<8x1xf32>
    %28 = math.log %27 : vector<8x1xf32>
    %29 = vector.broadcast %28 : vector<8x1xf32> to vector<8x128xf32>
    %30 = arith.subf %24, %29 : vector<8x128xf32>
    %31 = arith.index_cast %c0_i32_14 : i32 to index
    %c0_20 = arith.constant 0 : index
    %c0_21 = arith.constant 0 : index
    %32 = vector.load %arg6[%31, %c0_20, %c0_21] : memref<1x8x128xf32, #tpu.memory_space<vmem>>, vector<1x8x128xf32>
    %33 = vector.shape_cast %32 : vector<1x8x128xf32> to vector<8x128xf32>
    %34 = vector.shape_cast %30 : vector<8x128xf32> to vector<1x8x128xf32>
    tpu.vector_store %arg6[%31, %c0_20, %c0_21], %34 {strides = array<i32>} : memref<1x8x128xf32, #tpu.memory_space<vmem>>, vector<1x8x128xf32>,
    %c1_i32 = arith.constant 1 : i32
    %c0_22 = arith.constant 0 : index
    %c0_23 = arith.constant 0 : index
    %35 = vector.load %arg8[%c0_22, %c0_23] : memref<8x128xf32, #tpu.memory_space<vmem>>, vector<8x128xf32>
    tpu.vector_store %arg8[%c0_22, %c0_23], %19 {strides = array<i32>} : memref<8x128xf32, #tpu.memory_space<vmem>>, vector<8x128xf32>,
    %c0_i32_24 = arith.constant 0 : i32
    %36 = arith.cmpi eq, %arg0, %c0_i32_24 : i32
    %37 = arith.extui %36 : i1 to i32
    %c0_i32_25 = arith.constant 0 : i32
    %38 = arith.cmpi ne, %37, %c0_i32_25 : i32
    scf.if %38 {
      %c0_26 = arith.constant 0 : index
      %c0_27 = arith.constant 0 : index
      %39 = vector.load %arg7[%c0_26, %c0_27] : memref<8x128xf32, #tpu.memory_space<vmem>>, vector<8x128xf32>
      tpu.vector_store %arg7[%c0_26, %c0_27], %19 {strides = array<i32>} : memref<8x128xf32, #tpu.memory_space<vmem>>, vector<8x128xf32>,
    } else {
    }
    return
  }
  func.func @transform_0(%arg0: i32) -> (i32, i32, i32) {
    %c0_i32 = arith.constant 0 : i32
    %c0_i32_0 = arith.constant 0 : i32
    %c0_i32_1 = arith.constant 0 : i32
    return %arg0, %c0_i32, %c0_i32_0 : i32, i32, i32
  }
  func.func @transform_1(%arg0: i32) -> (i32, i32) {
    %c0_i32 = arith.constant 0 : i32
    %c0_i32_0 = arith.constant 0 : i32
    %c0_i32_1 = arith.constant 0 : i32
    return %c0_i32, %c0_i32_0 : i32, i32
  }
  func.func @transform_2(%arg0: i32) -> (i32, i32) {
    %c0_i32 = arith.constant 0 : i32
    %c0_i32_0 = arith.constant 0 : i32
    %c0_i32_1 = arith.constant 0 : i32
    return %c0_i32, %c0_i32_0 : i32, i32
  }
  func.func @transform_3(%arg0: i32) -> (i32, i32) {
    %c0_i32 = arith.constant 0 : i32
    %c0_i32_0 = arith.constant 0 : i32
    %c0_i32_1 = arith.constant 0 : i32
    return %c0_i32, %c0_i32_0 : i32, i32
  }
  func.func @transform_4(%arg0: i32) -> (i32, i32) {
    %c0_i32 = arith.constant 0 : i32
    %c0_i32_0 = arith.constant 0 : i32
    %c0_i32_1 = arith.constant 0 : i32
    return %c0_i32, %c0_i32_0 : i32, i32
  }
  func.func @transform_5(%arg0: i32) -> (i32, i32, i32) {
    %c0_i32 = arith.constant 0 : i32
    %c0_i32_0 = arith.constant 0 : i32
    %c0_i32_1 = arith.constant 0 : i32
    return %arg0, %c0_i32, %c0_i32_0 : i32, i32, i32
  }
  func.func @transform_6(%arg0: i32) -> (i32, i32) {
    %c0_i32 = arith.constant 0 : i32
    %c0_i32_0 = arith.constant 0 : i32
    %c0_i32_1 = arith.constant 0 : i32
    return %c0_i32, %c0_i32_0 : i32, i32
  }
}

</mosaic_0001>

<llo_original>
// kernel: rnn_sequence.1
$region0: #{rnn_sequence.1}
  #allocation0 [shape = 'u32[]', space=smem, size = 0x4, offset = 0x4, fixed_abs, tag = 'smem constant byte address 0x4 - core index']
  #allocation1 [shape = 'u32[144,128]{1,0:T(1,128)}', space=vmem, size = 0x12000, scoped, tag = 'internal scratch']
  #allocation2 [shape = 'f32[8,128]{1,0:T(8,128)}', space=vmem, size = 0x1000, scoped, tag = 'scratch operand']
  #allocation3 [shape = 'f32[1,8,256]{2,1,0:T(8,128)}', space=vmem, size = 0x2000, scoped, tag = 'scratch operand']
  %s0 = inlined_call_operand.vmem [shape: f32[1,8,128], index: 0, kind: input, shape index: {}]
  %s1 = inlined_call_operand.vmem [shape: f32[8,128], index: 1, kind: input, shape index: {}]
  %s2 = inlined_call_operand.vmem [shape: f32[128,256], index: 2, kind: input, shape index: {}]
  %s3 = inlined_call_operand.vmem [shape: f32[128,256], index: 3, kind: input, shape index: {}]
  %s4 = inlined_call_operand.vmem [shape: f32[1,256], index: 4, kind: input, shape index: {}]
  %s5 = inlined_call_operand.vmem [shape: f32[1,8,128], index: 5, kind: output, shape index: {0}]
  %s6 = inlined_call_operand.vmem [shape: f32[8,128], index: 6, kind: output, shape index: {1}]
  %7 = xla_tuple %s5, %s6
  %s8 = sld [smem:[#allocation0]]
  $region46: #{rnn_sequence.1} parent=0
    _
  %s10 = ssub.s32 1, %s8
  %s11 = scalar_select 0, %s10, %s8
  // Predicated region
  $region2: #{rnn_sequence.1} parent=0 // pred_check
    _
  $region3: #{rnn_sequence.1} parent=0 // pred_check_branch
    %13 = sbr.rel (0) target = $region5
  $region4: #{rnn_sequence.1} parent=0 // pred_region
    _
  $region5: #{rnn_sequence.1} parent=0 // pred_fallthru
    _
  // Predicated region
  $region6: #{rnn_sequence.1} parent=0 // pred_check
    _
  $region7: #{rnn_sequence.1} parent=0 // pred_check_branch
    %15 = sbr.rel (0) target = $region9
  $region8: #{rnn_sequence.1} parent=0 // pred_region
    _
  $region9: #{rnn_sequence.1} parent=0 // pred_fallthru
    _
  // Predicated region
  $region10: #{rnn_sequence.1} parent=0 // pred_check
    _
  $region11: #{rnn_sequence.1} parent=0 // pred_check_branch
    %17 = sbr.rel (0) target = $region13
  $region12: #{rnn_sequence.1} parent=0 // pred_region
    _
  $region13: #{rnn_sequence.1} parent=0 // pred_fallthru
    _
  // Predicated region
  $region14: #{rnn_sequence.1} parent=0 // pred_check
    _
  $region15: #{rnn_sequence.1} parent=0 // pred_check_branch
    %19 = sbr.rel (0) target = $region17
  $region16: #{rnn_sequence.1} parent=0 // pred_region
    _
  $region17: #{rnn_sequence.1} parent=0 // pred_fallthru
    _
  // Predicated region
  $region18: #{rnn_sequence.1} parent=0 // pred_check
    _
  $region19: #{rnn_sequence.1} parent=0 // pred_check_branch
    %21 = sbr.rel (0) target = $region21
  $region20: #{rnn_sequence.1} parent=0 // pred_region
    _
  $region21: #{rnn_sequence.1} parent=0 // pred_fallthru
    _
  %p22 = scmp.eq.s32.totalorder 0, 0
  // Predicated region
  $region22: #{rnn_sequence.1} parent=0 // pred_check
    %p23 = pneg %p22
  $region23: #{rnn_sequence.1} parent=0 // pred_check_branch
    %25 = sbr.rel (%p23) target = $region25
  $region24: #{rnn_sequence.1} parent=0 // pred_region
    %v26 = vld [vmem:[%s1] sm:$0xff]
    %27 = vst [vmem:[#allocation2] sm:$0xff] %v26
  $region25: #{rnn_sequence.1} parent=0 // pred_fallthru
    _
  %v28 = vld [vmem:[%s0] sm:$0xff]
  %v29 = vld [vmem:[%s2] sm:$0xff]
  %v30 = vld [vmem:[%s2 + $0x8] sm:$0xff]
  %v31 = vld [vmem:[%s2 + $0x10] sm:$0xff]
  %v32 = vld [vmem:[%s2 + $0x18] sm:$0xff]
  %v33 = vld [vmem:[%s2 + $0x20] sm:$0xff]
  %v34 = vld [vmem:[%s2 + $0x28] sm:$0xff]
  %v35 = vld [vmem:[%s2 + $0x30] sm:$0xff]
  %v36 = vld [vmem:[%s2 + $0x38] sm:$0xff]
  %v37 = vld [vmem:[%s2 + $0x40] sm:$0xff]
  %v38 = vld [vmem:[%s2 + $0x48] sm:$0xff]
  %v39 = vld [vmem:[%s2 + $0x50] sm:$0xff]
  %v40 = vld [vmem:[%s2 + $0x58] sm:$0xff]
  %v41 = vld [vmem:[%s2 + $0x60] sm:$0xff]
  %v42 = vld [vmem:[%s2 + $0x68] sm:$0xff]
  %v43 = vld [vmem:[%s2 + $0x70] sm:$0xff]
  %v44 = vld [vmem:[%s2 + $0x78] sm:$0xff]
  %v45 = vld [vmem:[%s2 + $0x80] sm:$0xff]
  %v46 = vld [vmem:[%s2 + $0x88] sm:$0xff]
  %v47 = vld [vmem:[%s2 + $0x90] sm:$0xff]
  %v48 = vld [vmem:[%s2 + $0x98] sm:$0xff]
  %v49 = vld [vmem:[%s2 + $0xa0] sm:$0xff]
  %v50 = vld [vmem:[%s2 + $0xa8] sm:$0xff]
  %v51 = vld [vmem:[%s2 + $0xb0] sm:$0xff]
  %v52 = vld [vmem:[%s2 + $0xb8] sm:$0xff]
  %v53 = vld [vmem:[%s2 + $0xc0] sm:$0xff]
  %v54 = vld [vmem:[%s2 + $0xc8] sm:$0xff]
  %v55 = vld [vmem:[%s2 + $0xd0] sm:$0xff]
  %v56 = vld [vmem:[%s2 + $0xd8] sm:$0xff]
  %v57 = vld [vmem:[%s2 + $0xe0] sm:$0xff]
  %v58 = vld [vmem:[%s2 + $0xe8] sm:$0xff]
  %v59 = vld [vmem:[%s2 + $0xf0] sm:$0xff]
  %v60 = vld [vmem:[%s2 + $0xf8] sm:$0xff]
  %v61 = vld [vmem:[%s4] sm:$0x3]
  %v63 = vlaneseq
  %v64 = vshrl.u32 %v63, 7
  %v65 = vsub.s32 0, %v64
  %v66 = vrot.slane %v61, %v65
  %v67 = vlaneseq
  %v68 = vshrl.u32 %v67, 7
  %v69 = vsub.s32 1, %v68
  %v70 = vrot.slane %v61, %v69
  %73 = vmatprep.subr.mxu0 %v30
  %74 = vmatpush1.msra.mxu0 %v29
  %75 = vmatprep.subr.mxu0 %v32
  %76 = vmatpush1.msra.mxu0 %v31
  %77 = vmatprep.subr.mxu0 %v34
  %78 = vmatpush1.msra.mxu0 %v33
  %79 = vmatprep.subr.mxu0 %v36
  %80 = vmatpush1.msra.mxu0 %v35
  %81 = vmatprep.subr.mxu0 %v38
  %82 = vmatpush1.msra.mxu0 %v37
  %83 = vmatprep.subr.mxu0 %v40
  %84 = vmatpush1.msra.mxu0 %v39
  %85 = vmatprep.subr.mxu0 %v42
  %86 = vmatpush1.msra.mxu0 %v41
  %87 = vmatprep.subr.mxu0 %v44
  %88 = vmatpush1.msra.mxu0 %v43
  %89 = vmatprep.subr.mxu0 %v46
  %90 = vmatpush1.msra.mxu0 %v45
  %91 = vmatprep.subr.mxu0 %v48
  %92 = vmatpush1.msra.mxu0 %v47
  %93 = vmatprep.subr.mxu0 %v50
  %94 = vmatpush1.msra.mxu0 %v49
  %95 = vmatprep.subr.mxu0 %v52
  %96 = vmatpush1.msra.mxu0 %v51
  %97 = vmatprep.subr.mxu0 %v54
  %98 = vmatpush1.msra.mxu0 %v53
  %99 = vmatprep.subr.mxu0 %v56
  %100 = vmatpush1.msra.mxu0 %v55
  %101 = vmatprep.subr.mxu0 %v58
  %102 = vmatpush1.msra.mxu0 %v57
  %103 = vmatprep.subr.mxu0 %v60
  %104 = vmatpush1.msra.mxu0 %v59
  %105 = vmatprep.subr.mxu0 0.0
  %106 = vmatpush1.msra.mxu0 0.0
  %107 = vmatprep.subr.mxu0 0.0
  %108 = vmatpush1.msra.mxu0 0.0
  %109 = vmatprep.subr.mxu0 0.0
  %110 = vmatpush1.msra.mxu0 0.0
  %111 = vmatprep.subr.mxu0 0.0
  %112 = vmatpush1.msra.mxu0 0.0
  %113 = vmatprep.subr.mxu0 0.0
  %114 = vmatpush1.msra.mxu0 0.0
  %115 = vmatprep.subr.mxu0 0.0
  %116 = vmatpush1.msra.mxu0 0.0
  %117 = vmatprep.subr.mxu0 0.0
  %118 = vmatpush1.msra.mxu0 0.0
  %119 = vmatprep.subr.mxu0 0.0
  %120 = vmatpush1.msra.mxu0 0.0
  %121 = vmatprep.subr.mxu0 0.0
  %122 = vmatpush1.msra.mxu0 0.0
  %123 = vmatprep.subr.mxu0 0.0
  %124 = vmatpush1.msra.mxu0 0.0
  %125 = vmatprep.subr.mxu0 0.0
  %126 = vmatpush1.msra.mxu0 0.0
  %127 = vmatprep.subr.mxu0 0.0
  %128 = vmatpush1.msra.mxu0 0.0
  %129 = vmatprep.subr.mxu0 0.0
  %130 = vmatpush1.msra.mxu0 0.0
  %131 = vmatprep.subr.mxu0 0.0
  %132 = vmatpush1.msra.mxu0 0.0
  %133 = vmatprep.subr.mxu0 0.0
  %134 = vmatpush1.msra.mxu0 0.0
  %135 = vmatprep.subr.mxu0 0.0
  %136 = vmatpush1.msra.mxu0 0.0
  %137 = vmatprep.mubr.f32.mxu0 0.0
  %138 = vmatmul.mubr.f32.gmra.mrb[0].mxu0 %v28
  %v139 = vpop.f32.mrb[0].mxu0
  %v140 = vadd.f32 %v66, %v139
  %v141 = vpop.f32.mrb[0].mxu0
  %v142 = vadd.f32 %v70, %v141
  %143 = vdwg.mxu0
  %144 = vst [vmem:[#allocation3] sm:$0xff] %v140
  %145 = vst [vmem:[#allocation3 + $0x8] sm:$0xff] %v142
  %v146 = vld [vmem:[%s3] sm:$0xff]
  %v147 = vld [vmem:[%s3 + $0x8] sm:$0xff]
  %v148 = vld [vmem:[%s3 + $0x10] sm:$0xff]
  %v149 = vld [vmem:[%s3 + $0x18] sm:$0xff]
  %v150 = vld [vmem:[%s3 + $0x20] sm:$0xff]
  %v151 = vld [vmem:[%s3 + $0x28] sm:$0xff]
  %v152 = vld [vmem:[%s3 + $0x30] sm:$0xff]
  %v153 = vld [vmem:[%s3 + $0x38] sm:$0xff]
  %v154 = vld [vmem:[%s3 + $0x40] sm:$0xff]
  %v155 = vld [vmem:[%s3 + $0x48] sm:$0xff]
  %v156 = vld [vmem:[%s3 + $0x50] sm:$0xff]
  %v157 = vld [vmem:[%s3 + $0x58] sm:$0xff]
  %v158 = vld [vmem:[%s3 + $0x60] sm:$0xff]
  %v159 = vld [vmem:[%s3 + $0x68] sm:$0xff]
  %v160 = vld [vmem:[%s3 + $0x70] sm:$0xff]
  %v161 = vld [vmem:[%s3 + $0x78] sm:$0xff]
  %v162 = vld [vmem:[%s3 + $0x80] sm:$0xff]
  %v163 = vld [vmem:[%s3 + $0x88] sm:$0xff]
  %v164 = vld [vmem:[%s3 + $0x90] sm:$0xff]
  %v165 = vld [vmem:[%s3 + $0x98] sm:$0xff]
  %v166 = vld [vmem:[%s3 + $0xa0] sm:$0xff]
  %v167 = vld [vmem:[%s3 + $0xa8] sm:$0xff]
  %v168 = vld [vmem:[%s3 + $0xb0] sm:$0xff]
  %v169 = vld [vmem:[%s3 + $0xb8] sm:$0xff]
  %v170 = vld [vmem:[%s3 + $0xc0] sm:$0xff]
  %v171 = vld [vmem:[%s3 + $0xc8] sm:$0xff]
  %v172 = vld [vmem:[%s3 + $0xd0] sm:$0xff]
  %v173 = vld [vmem:[%s3 + $0xd8] sm:$0xff]
  %v174 = vld [vmem:[%s3 + $0xe0] sm:$0xff]
  %v175 = vld [vmem:[%s3 + $0xe8] sm:$0xff]
  %v176 = vld [vmem:[%s3 + $0xf0] sm:$0xff]
  %v177 = vld [vmem:[%s3 + $0xf8] sm:$0xff]
  %v178 = vld [vmem:[#allocation2] sm:$0xff]
  %v179 = vld [vmem:[#allocation3] sm:$0xff]
  %v180 = vld [vmem:[#allocation3 + $0x8] sm:$0xff]
  %181 = vmatprep.subr.mxu0 %v147
  %182 = vmatpush1.msra.mxu0 %v146
  %183 = vmatprep.subr.mxu0 %v149
  %184 = vmatpush1.msra.mxu0 %v148
  %185 = vmatprep.subr.mxu0 %v151
  %186 = vmatpush1.msra.mxu0 %v150
  %187 = vmatprep.subr.mxu0 %v153
  %188 = vmatpush1.msra.mxu0 %v152
  %189 = vmatprep.subr.mxu0 %v155
  %190 = vmatpush1.msra.mxu0 %v154
  %191 = vmatprep.subr.mxu0 %v157
  %192 = vmatpush1.msra.mxu0 %v156
  %193 = vmatprep.subr.mxu0 %v159
  %194 = vmatpush1.msra.mxu0 %v158
  %195 = vmatprep.subr.mxu0 %v161
  %196 = vmatpush1.msra.mxu0 %v160
  %197 = vmatprep.subr.mxu0 %v163
  %198 = vmatpush1.msra.mxu0 %v162
  %199 = vmatprep.subr.mxu0 %v165
  %200 = vmatpush1.msra.mxu0 %v164
  %201 = vmatprep.subr.mxu0 %v167
  %202 = vmatpush1.msra.mxu0 %v166
  %203 = vmatprep.subr.mxu0 %v169
  %204 = vmatpush1.msra.mxu0 %v168
  %205 = vmatprep.subr.mxu0 %v171
  %206 = vmatpush1.msra.mxu0 %v170
  %207 = vmatprep.subr.mxu0 %v173
  %208 = vmatpush1.msra.mxu0 %v172
  %209 = vmatprep.subr.mxu0 %v175
  %210 = vmatpush1.msra.mxu0 %v174
  %211 = vmatprep.subr.mxu0 %v177
  %212 = vmatpush1.msra.mxu0 %v176
  %213 = vmatprep.subr.mxu0 0.0
  %214 = vmatpush1.msra.mxu0 0.0
  %215 = vmatprep.subr.mxu0 0.0
  %216 = vmatpush1.msra.mxu0 0.0
  %217 = vmatprep.subr.mxu0 0.0
  %218 = vmatpush1.msra.mxu0 0.0
  %219 = vmatprep.subr.mxu0 0.0
  %220 = vmatpush1.msra.mxu0 0.0
  %221 = vmatprep.subr.mxu0 0.0
  %222 = vmatpush1.msra.mxu0 0.0
  %223 = vmatprep.subr.mxu0 0.0
  %224 = vmatpush1.msra.mxu0 0.0
  %225 = vmatprep.subr.mxu0 0.0
  %226 = vmatpush1.msra.mxu0 0.0
  %227 = vmatprep.subr.mxu0 0.0
  %228 = vmatpush1.msra.mxu0 0.0
  %229 = vmatprep.subr.mxu0 0.0
  %230 = vmatpush1.msra.mxu0 0.0
  %231 = vmatprep.subr.mxu0 0.0
  %232 = vmatpush1.msra.mxu0 0.0
  %233 = vmatprep.subr.mxu0 0.0
  %234 = vmatpush1.msra.mxu0 0.0
  %235 = vmatprep.subr.mxu0 0.0
  %236 = vmatpush1.msra.mxu0 0.0
  %237 = vmatprep.subr.mxu0 0.0
  %238 = vmatpush1.msra.mxu0 0.0
  %239 = vmatprep.subr.mxu0 0.0
  %240 = vmatpush1.msra.mxu0 0.0
  %241 = vmatprep.subr.mxu0 0.0
  %242 = vmatpush1.msra.mxu0 0.0
  %243 = vmatprep.subr.mxu0 0.0
  %244 = vmatpush1.msra.mxu0 0.0
  %245 = vmatprep.mubr.f32.mxu0 0.0
  %246 = vmatmul.mubr.f32.gmra.mrb[0].mxu0 %v178
  %v247 = vpop.f32.mrb[0].mxu0
  %v248 = vadd.f32 0.0, %v247
  %v249 = vpop.f32.mrb[0].mxu0
  %v250 = vadd.f32 0.0, %v249
  %251 = vdwg.mxu0
  %v252 = vadd.f32 %v179, %v248
  %v253 = vadd.f32 %v180, %v250
  %254 = vmax.xlane.f32.xlu0 %v253
  %v255 = vpop.xlane.xlu0 %254
  %v256 = vsub.f32 %v253, %v255
  %v257 = vmul.f32 %v256, 1.442695
  %v258 = vpow.pop %v257
  %259 = vadd.xlane.f32.xlu0 %v258
  %v260 = vpop.xlane.xlu0 %259
  %v261 = vlog2.pop %v260
  %v262 = vmul.f32 %v261, 0.6931472
  %v263 = vsub.f32 %v256, %v262
  %264 = vst [vmem:[%s5] sm:$0xff] %v263
  %265 = vst [vmem:[#allocation2] sm:$0xff] %v252
  // Predicated region
  $region26: #{rnn_sequence.1} parent=0 // pred_check
    %p266 = pneg %p22
  $region27: #{rnn_sequence.1} parent=0 // pred_check_branch
    %268 = sbr.rel (%p266) target = $region29
  $region28: #{rnn_sequence.1} parent=0 // pred_region
    %269 = vst [vmem:[%s6] sm:$0xff] %v252
  $region29: #{rnn_sequence.1} parent=0 // pred_fallthru
    _
  // Predicated region
  $region30: #{rnn_sequence.1} parent=0 // pred_check
    _
  $region31: #{rnn_sequence.1} parent=0 // pred_check_branch
    %271 = sbr.rel (0) target = $region33
  $region32: #{rnn_sequence.1} parent=0 // pred_region
    _
  $region33: #{rnn_sequence.1} parent=0 // pred_fallthru
    _
  // Predicated region
  $region34: #{rnn_sequence.1} parent=0 // pred_check
    _
  $region35: #{rnn_sequence.1} parent=0 // pred_check_branch
    %273 = sbr.rel (0) target = $region37
  $region36: #{rnn_sequence.1} parent=0 // pred_region
    _
  $region37: #{rnn_sequence.1} parent=0 // pred_fallthru
    _
  // Predicated region
  $region38: #{rnn_sequence.1} parent=0 // pred_check
    _
  $region39: #{rnn_sequence.1} parent=0 // pred_check_branch
    %275 = sbr.rel (0) target = $region41
  $region40: #{rnn_sequence.1} parent=0 // pred_region
    _
  $region41: #{rnn_sequence.1} parent=0 // pred_fallthru
    _
  // Predicated region
  $region42: #{rnn_sequence.1} parent=0 // pred_check
    _
  $region43: #{rnn_sequence.1} parent=0 // pred_check_branch
    %277 = sbr.rel (0) target = $region45
  $region44: #{rnn_sequence.1} parent=0 // pred_region
    _
  $region45: #{rnn_sequence.1} parent=0 // pred_fallthru
    _

</llo_original>
